<compile_context>
chip_gen: v7x
topology: tpu7x:2x2x1
jax: 0.10.0
libtpu: 0.0.40
codegen_flags: <defaults>
</compile_context>

<pallas_src>
import jax
import jax.numpy as jnp
from jax.experimental import pallas as pl
from jax.experimental.pallas import tpu as pltpu


def conv1x1_kernel(x_ref, wt_ref, ss_ref, o_ref, acc_ref):
    k = pl.program_id(2)

    @pl.when(k == 0)
    def _():
        acc_ref[...] = jnp.zeros_like(acc_ref)

    # bf16 x bf16 -> f32 accumulate on the MXU.
    acc_ref[...] += jnp.dot(
        x_ref[...], wt_ref[...], preferred_element_type=jnp.float32
    )

    @pl.when(k == pl.num_programs(2) - 1)
    def _():
        scale = ss_ref[0:1, :]   # (1, tn) — folded gamma / sqrt(var + eps)
        shift = ss_ref[1:2, :]   # (1, tn) — folded beta - mean * scale
        y = acc_ref[...] * scale + shift
        y = jnp.where(y >= 0.0, y, 0.2 * y)          # LeakyReLU(0.2)
        o_ref[...] = y.astype(o_ref.dtype)


def _round_up(v, m):
    return ((v + m - 1) // m) * m


def conv1x1_forward(x, weight, gamma, beta, running_mean, running_var,
                    eps=1e-5, *, tm=256, tn=256, tk=256):
    """x: (N, C_in) f32. weight: (C_out, C_in) f32 (PyTorch Linear layout)."""
    n, c_in = x.shape
    c_out = weight.shape[0]

    # --- fold BatchNorm1d (eval) into per-channel scale/shift (f32 glue) ---
    inv_std = 1.0 / jnp.sqrt(running_var.astype(jnp.float32) + eps)
    scale = gamma.astype(jnp.float32) * inv_std
    shift = beta.astype(jnp.float32) - running_mean.astype(jnp.float32) * scale
    ss = jnp.stack([scale, shift], axis=0)            # (2, C_out)

    # --- bf16 operands for the MXU (accumulate stays f32 in-kernel) ---
    x_bf = x.astype(jnp.bfloat16)                     # (N, C_in)
    w_t = weight.T.astype(jnp.bfloat16)               # (C_in, C_out)

    # --- clamp tiles for small problems, keep (8, 128) alignment ---
    tm_e = min(tm, _round_up(n, 8))
    tk_e = min(tk, _round_up(c_in, 128))
    tn_e = min(tn, _round_up(c_out, 128))

    # --- pad to tile multiples (lane-dense output; zero pads are inert) ---
    n_p = _round_up(n, tm_e)
    ci_p = _round_up(c_in, tk_e)
    co_p = _round_up(c_out, tn_e)
    x_p = jnp.pad(x_bf, ((0, n_p - n), (0, ci_p - c_in)))
    w_p = jnp.pad(w_t, ((0, ci_p - c_in), (0, co_p - c_out)))
    ss_p = jnp.pad(ss, ((0, 0), (0, co_p - c_out)))

    grid = (n_p // tm_e, co_p // tn_e, ci_p // tk_e)  # reduction axis last

    out = pl.pallas_call(
        conv1x1_kernel,
        out_shape=jax.ShapeDtypeStruct((n_p, co_p), x.dtype),
        grid_spec=pltpu.PrefetchScalarGridSpec(
            num_scalar_prefetch=0,
            grid=grid,
            in_specs=[
                pl.BlockSpec((tm_e, tk_e), lambda i, j, k: (i, k)),  # x tile
                pl.BlockSpec((tk_e, tn_e), lambda i, j, k: (k, j)),  # W_t tile
                pl.BlockSpec((2, tn_e), lambda i, j, k: (0, j)),     # scale/shift
            ],
            out_specs=pl.BlockSpec((tm_e, tn_e), lambda i, j, k: (i, j)),
            scratch_shapes=[pltpu.VMEM((tm_e, tn_e), jnp.float32)],
        ),
        compiler_params=pltpu.CompilerParams(
            dimension_semantics=("parallel", "parallel", "arbitrary"),
            vmem_limit_bytes=32 * 1024 * 1024,
        ),
        cost_estimate=pl.CostEstimate(
            flops=2 * n_p * ci_p * co_p,
            bytes_accessed=(x_p.size * 2 + w_p.size * 2
                            + ss_p.size * 4 + n_p * co_p * 4),
            transcendentals=0,
        ),
    )(x_p, w_p, ss_p)

    return out[:n, :c_out]


if __name__ == "__main__":
    key = jax.random.PRNGKey(0)
    k_x, k_w, k_g, k_b, k_m, k_v = jax.random.split(key, 6)

    # Small shapes consistent with the module: batch N=8, in=32, out=16.
    N, C_IN, C_OUT = 8, 32, 16

    x = jax.random.normal(k_x, (N, C_IN), dtype=jnp.float32)
    # nn.Linear(C_IN, C_OUT, bias=False).weight -> (C_OUT, C_IN)
    weight = jax.random.normal(k_w, (C_OUT, C_IN), dtype=jnp.float32) * (
        1.0 / jnp.sqrt(C_IN)
    )
    # nn.BatchNorm1d(C_OUT) parameters / running stats (eval mode)
    gamma = 1.0 + 0.1 * jax.random.normal(k_g, (C_OUT,), dtype=jnp.float32)
    beta = 0.1 * jax.random.normal(k_b, (C_OUT,), dtype=jnp.float32)
    running_mean = 0.1 * jax.random.normal(k_m, (C_OUT,), dtype=jnp.float32)
    running_var = jnp.abs(jax.random.normal(k_v, (C_OUT,), dtype=jnp.float32)) + 0.5

    out = conv1x1_forward(x, weight, gamma, beta, running_mean, running_var)
    out = jax.block_until_ready(out)

    # Pure-JAX reference using the same bf16 operand cast the kernel uses.
    eps = 1e-5
    xb = x.astype(jnp.bfloat16).astype(jnp.float32)
    wb = weight.T.astype(jnp.bfloat16).astype(jnp.float32)
    ref = xb @ wb
    ref = (ref - running_mean) / jnp.sqrt(running_var + eps) * gamma + beta
    ref = jnp.where(ref >= 0.0, ref, 0.2 * ref)
    assert out.shape == (N, C_OUT)
    assert jnp.allclose(out, ref, atol=2e-2, rtol=2e-2), "mismatch vs reference"

    print("KERNEL_OK")
</pallas_src>

<mosaic_0001>
module attributes {stable_mosaic.version = 11 : i64} {
  func.func @conv1x1_kernel(%arg0: i32, %arg1: i32, %arg2: i32, %arg3: memref<8x128xbf16, #tpu.memory_space<vmem>>, %arg4: memref<128x128xbf16, #tpu.memory_space<vmem>>, %arg5: memref<2x128xf32, #tpu.memory_space<vmem>>, %arg6: memref<8x128xf32, #tpu.memory_space<vmem>>, %arg7: memref<8x128xf32, #tpu.memory_space<vmem>>) attributes {dimension_semantics = [#tpu.dimension_semantics<parallel>, #tpu.dimension_semantics<parallel>, #tpu.dimension_semantics<arbitrary>], iteration_bounds = array<i64: 1, 1, 1>, scalar_prefetch = 0 : i64, scratch_operands = 1 : i64, tpu.core_type = #tpu.core_type<tc>, window_params = [{transform_indices = @transform_0, window_bounds = array<i64: 8, 128>}, {transform_indices = @transform_1, window_bounds = array<i64: 128, 128>}, {transform_indices = @transform_2, window_bounds = array<i64: 2, 128>}, {transform_indices = @transform_3, window_bounds = array<i64: 8, 128>}]} {
    %c0_i32 = arith.constant 0 : i32
    %0 = arith.cmpi eq, %arg2, %c0_i32 : i32
    %1 = arith.extui %0 : i1 to i32
    %c0_i32_0 = arith.constant 0 : i32
    %2 = arith.cmpi ne, %1, %c0_i32_0 : i32
    scf.if %2 {
      %cst_10 = arith.constant 0.000000e+00 : f32
      %12 = vector.broadcast %cst_10 : f32 to vector<8x128xf32>
      %c0_11 = arith.constant 0 : index
      %c0_12 = arith.constant 0 : index
      %13 = vector.load %arg7[%c0_11, %c0_12] : memref<8x128xf32, #tpu.memory_space<vmem>>, vector<8x128xf32>
      tpu.vector_store %arg7[%c0_11, %c0_12], %12 {strides = array<i32>} : memref<8x128xf32, #tpu.memory_space<vmem>>, vector<8x128xf32>,
    } else {
    }
    %c0 = arith.constant 0 : index
    %c0_1 = arith.constant 0 : index
    %3 = vector.load %arg7[%c0, %c0_1] : memref<8x128xf32, #tpu.memory_space<vmem>>, vector<8x128xf32>
    %c0_2 = arith.constant 0 : index
    %c0_3 = arith.constant 0 : index
    %4 = vector.load %arg3[%c0_2, %c0_3] : memref<8x128xbf16, #tpu.memory_space<vmem>>, vector<8x128xbf16>
    %c0_4 = arith.constant 0 : index
    %c0_5 = arith.constant 0 : index
    %5 = vector.load %arg4[%c0_4, %c0_5] : memref<128x128xbf16, #tpu.memory_space<vmem>>, vector<128x128xbf16>
    %cst = arith.constant dense<0.000000e+00> : vector<8x128xf32>
    %6 = tpu.matmul %4, %5, %cst {dimension_numbers = #tpu.dot_dimension_numbers<[1], [0], [0], [1], [0, 0, 1, 1], [], []>} : vector<8x128xbf16>, vector<128x128xbf16>, vector<8x128xf32> -> vector<8x128xf32>
    %7 = arith.addf %3, %6 : vector<8x128xf32>
    %c0_6 = arith.constant 0 : index
    %c0_7 = arith.constant 0 : index
    %8 = vector.load %arg7[%c0_6, %c0_7] : memref<8x128xf32, #tpu.memory_space<vmem>>, vector<8x128xf32>
    tpu.vector_store %arg7[%c0_6, %c0_7], %7 {strides = array<i32>} : memref<8x128xf32, #tpu.memory_space<vmem>>, vector<8x128xf32>,
    %c0_i32_8 = arith.constant 0 : i32
    %9 = arith.cmpi eq, %arg2, %c0_i32_8 : i32
    %10 = arith.extui %9 : i1 to i32
    %c0_i32_9 = arith.constant 0 : i32
    %11 = arith.cmpi ne, %10, %c0_i32_9 : i32
    scf.if %11 {
      %c0_10 = arith.constant 0 : index
      %c0_11 = arith.constant 0 : index
      %12 = vector.load %arg5[%c0_10, %c0_11] : memref<2x128xf32, #tpu.memory_space<vmem>>, vector<1x128xf32>
      %c1 = arith.constant 1 : index
      %c0_12 = arith.constant 0 : index
      %13 = vector.load %arg5[%c1, %c0_12] : memref<2x128xf32, #tpu.memory_space<vmem>>, vector<1x128xf32>
      %c0_13 = arith.constant 0 : index
      %c0_14 = arith.constant 0 : index
      %14 = vector.load %arg7[%c0_13, %c0_14] : memref<8x128xf32, #tpu.memory_space<vmem>>, vector<8x128xf32>
      %15 = vector.broadcast %12 : vector<1x128xf32> to vector<8x128xf32>
      %16 = arith.mulf %14, %15 : vector<8x128xf32>
      %17 = vector.broadcast %13 : vector<1x128xf32> to vector<8x128xf32>
      %18 = arith.addf %16, %17 : vector<8x128xf32>
      %cst_15 = arith.constant 0.000000e+00 : f32
      %19 = vector.broadcast %cst_15 : f32 to vector<8x128xf32>
      %20 = arith.cmpf oge, %18, %19 : vector<8x128xf32>
      %cst_16 = arith.constant 2.000000e-01 : f32
      %21 = vector.broadcast %cst_16 : f32 to vector<8x128xf32>
      %22 = arith.mulf %21, %18 : vector<8x128xf32>
      %23 = arith.select %20, %18, %22 : vector<8x128xi1>, vector<8x128xf32>
      %c0_17 = arith.constant 0 : index
      %c0_18 = arith.constant 0 : index
      %24 = vector.load %arg6[%c0_17, %c0_18] : memref<8x128xf32, #tpu.memory_space<vmem>>, vector<8x128xf32>
      tpu.vector_store %arg6[%c0_17, %c0_18], %23 {strides = array<i32>} : memref<8x128xf32, #tpu.memory_space<vmem>>, vector<8x128xf32>,
    } else {
    }
    return
  }
  func.func @transform_0(%arg0: i32, %arg1: i32, %arg2: i32) -> (i32, i32) {
    %c0_i32 = arith.constant 0 : i32
    return %arg0, %arg2 : i32, i32
  }
  func.func @transform_1(%arg0: i32, %arg1: i32, %arg2: i32) -> (i32, i32) {
    %c0_i32 = arith.constant 0 : i32
    return %arg2, %arg1 : i32, i32
  }
  func.func @transform_2(%arg0: i32, %arg1: i32, %arg2: i32) -> (i32, i32) {
    %c0_i32 = arith.constant 0 : i32
    %c0_i32_0 = arith.constant 0 : i32
    return %c0_i32, %arg1 : i32, i32
  }
  func.func @transform_3(%arg0: i32, %arg1: i32, %arg2: i32) -> (i32, i32) {
    %c0_i32 = arith.constant 0 : i32
    return %arg0, %arg1 : i32, i32
  }
}

</mosaic_0001>

<llo_original>
// kernel: tpu_custom_call.1
$region0: #{tpu_custom_call.1}
  #allocation0 [shape = 'u32[]', space=smem, size = 0x4, offset = 0x4, fixed_abs, tag = 'smem constant byte address 0x4 - core index']
  #allocation1 [shape = 'u32[144,128]{1,0:T(1,128)}', space=vmem, size = 0x12000, scoped, tag = 'internal scratch']
  #allocation2 [shape = 'f32[8,128]{1,0:T(8,128)}', space=vmem, size = 0x1000, scoped, tag = 'scratch operand']
  %s0 = inlined_call_operand.hbm [shape: bf16[8,128], index: 0, kind: input, shape index: {}]
  %s1 = inlined_call_operand.hbm [shape: bf16[128,128], index: 1, kind: input, shape index: {}]
  %s2 = inlined_call_operand.vmem [shape: f32[2,128], index: 2, kind: input, shape index: {}]
  %s3 = inlined_call_operand.hbm [shape: f32[8,128], index: 3, kind: output, shape index: {}]
  %s4 = sld [smem:[#allocation0]]
  $region38: #{tpu_custom_call.1} parent=0
    _
  %s6 = ssub.s32 1, %s4
  %s7 = scalar_select 0, %s6, %s4
  $region1: #{tpu_custom_call.1} parent=0
    #allocation3 [shape = 'u8[2048]{0}', space=vmem, size = 0x800, scoped, tag = 'input window, operand 0, single buffered']
    #allocation4 [shape = 's32[1]{0}', space=sflag, size = 0x4, scoped, tag = 'scoped memory for tpu_custom_call.1']
    #allocation5 [shape = 's32[1]{0}', space=sflag, size = 0x4, scoped, tag = 'scoped memory for tpu_custom_call.1']
    #allocation6 [shape = 'u8[32768]{0}', space=vmem, size = 0x8000, scoped, tag = 'input window, operand 1, single buffered']
    #allocation7 [shape = 's32[1]{0}', space=sflag, size = 0x4, scoped, tag = 'scoped memory for tpu_custom_call.1']
    #allocation8 [shape = 'u8[4096]{0}', space=vmem, size = 0x1000, scoped, tag = 'output window, operand 0, single buffered']
    %8 = vsyncpa [#allocation4], 0
    %9 = vsyncpa [#allocation7], 0
    %10 = vsyncpa [#allocation5], 0
    // Predicated region
    $region2: #{tpu_custom_call.1} parent=1 // pred_check
      _
    $region3: #{tpu_custom_call.1} parent=1 // pred_check_branch
      %12 = sbr.rel (0) target = $region5
    $region4: #{tpu_custom_call.1} parent=1 // pred_region
      %s14 = ssub.s32 64, 64
      %15 = vsyncadd [#allocation4], %s14
      %s17 = sshll.u32 [#allocation3], 4
      %s18 = int_to_ptr.vmem [resolvable:$true] %s17
      %20 = dma.hbm_to_vmem [thread:$0]  %s0, 64, %s18, [#allocation4]
    $region5: #{tpu_custom_call.1} parent=1 // pred_fallthru
      _
    // Predicated region
    $region6: #{tpu_custom_call.1} parent=1 // pred_check
      _
    $region7: #{tpu_custom_call.1} parent=1 // pred_check_branch
      %22 = sbr.rel (0) target = $region9
    $region8: #{tpu_custom_call.1} parent=1 // pred_region
      %s24 = ssub.s32 1024, 1024
      %25 = vsyncadd [#allocation7], %s24
      %s26 = sshll.u32 [#allocation6], 4
      %s27 = int_to_ptr.vmem [resolvable:$true] %s26
      %32 = dma.hbm_to_vmem [thread:$0]  %s1, 1024, %s27, [#allocation7], 64, 64, 4
    $region9: #{tpu_custom_call.1} parent=1 // pred_fallthru
      _
    // Predicated region
    $region10: #{tpu_custom_call.1} parent=1 // pred_check
      _
    $region11: #{tpu_custom_call.1} parent=1 // pred_check_branch
      %34 = sbr.rel (0) target = $region13
    $region12: #{tpu_custom_call.1} parent=1 // pred_region
      _
    $region13: #{tpu_custom_call.1} parent=1 // pred_fallthru
      _
    // Predicated region
    $region14: #{tpu_custom_call.1} parent=1 // pred_check
      _
    $region15: #{tpu_custom_call.1} parent=1 // pred_check_branch
      %36 = sbr.rel (0) target = $region17
    $region16: #{tpu_custom_call.1} parent=1 // pred_region
      %37 = dma.done [#allocation4], 64
    $region17: #{tpu_custom_call.1} parent=1 // pred_fallthru
      _
    // Predicated region
    $region18: #{tpu_custom_call.1} parent=1 // pred_check
      _
    $region19: #{tpu_custom_call.1} parent=1 // pred_check_branch
      %39 = sbr.rel (0) target = $region21
    $region20: #{tpu_custom_call.1} parent=1 // pred_region
      %40 = dma.done [#allocation7], 1024
    $region21: #{tpu_custom_call.1} parent=1 // pred_fallthru
      _
    %p42 = scmp.eq.s32.totalorder 0, 0
    // Predicated region
    $region22: #{tpu_custom_call.1} parent=1 // pred_check
      %p43 = pneg %p42
    $region23: #{tpu_custom_call.1} parent=1 // pred_check_branch
      %45 = sbr.rel (%p43) target = $region25
    $region24: #{tpu_custom_call.1} parent=1 // pred_region
      %46 = vst [vmem:[#allocation2] sm:$0xff] 0.0
    $region25: #{tpu_custom_call.1} parent=1 // pred_fallthru
      _
    %v47 = vld [vmem:[#allocation2] sm:$0xff]
    %v48 = vld [vmem:[#allocation3] sm:$0xf]
    %v49 = vld [vmem:[#allocation6] sm:$0xf]
    %v50 = vld [vmem:[#allocation6 + $0x4] sm:$0xf]
    %v51 = vld [vmem:[#allocation6 + $0x8] sm:$0xf]
    %v52 = vld [vmem:[#allocation6 + $0xc] sm:$0xf]
    %v53 = vld [vmem:[#allocation6 + $0x10] sm:$0xf]
    %v54 = vld [vmem:[#allocation6 + $0x14] sm:$0xf]
    %v55 = vld [vmem:[#allocation6 + $0x18] sm:$0xf]
    %v56 = vld [vmem:[#allocation6 + $0x1c] sm:$0xf]
    %v57 = vld [vmem:[#allocation6 + $0x20] sm:$0xf]
    %v58 = vld [vmem:[#allocation6 + $0x24] sm:$0xf]
    %v59 = vld [vmem:[#allocation6 + $0x28] sm:$0xf]
    %v60 = vld [vmem:[#allocation6 + $0x2c] sm:$0xf]
    %v61 = vld [vmem:[#allocation6 + $0x30] sm:$0xf]
    %v62 = vld [vmem:[#allocation6 + $0x34] sm:$0xf]
    %v63 = vld [vmem:[#allocation6 + $0x38] sm:$0xf]
    %v64 = vld [vmem:[#allocation6 + $0x3c] sm:$0xf]
    %v81 = vunpack.c.l.b16 %v49
    %v82 = vunpack.c.l.b16 %v50
    %v83 = vunpack.c.l.b16 %v51
    %v84 = vunpack.c.l.b16 %v52
    %v85 = vunpack.c.l.b16 %v53
    %v86 = vunpack.c.l.b16 %v54
    %v87 = vunpack.c.l.b16 %v55
    %v88 = vunpack.c.l.b16 %v56
    %v89 = vunpack.c.l.b16 %v57
    %v90 = vunpack.c.l.b16 %v58
    %v91 = vunpack.c.l.b16 %v59
    %v92 = vunpack.c.l.b16 %v60
    %v93 = vunpack.c.l.b16 %v61
    %v94 = vunpack.c.l.b16 %v62
    %v95 = vunpack.c.l.b16 %v63
    %v96 = vunpack.c.l.b16 %v64
    %v97 = vpack.c.b16 %v82, %v81
    %v98 = vpack.c.b16 %v84, %v83
    %v99 = vpack.c.b16 %v86, %v85
    %v100 = vpack.c.b16 %v88, %v87
    %v101 = vpack.c.b16 %v90, %v89
    %v102 = vpack.c.b16 %v92, %v91
    %v103 = vpack.c.b16 %v94, %v93
    %v104 = vpack.c.b16 %v96, %v95
    %113 = vmatprep.subr.bf16.mxu0 0
    %114 = vmatpush1.bf16.msra.mxu0 %v97
    %115 = vmatprep.subr.bf16.mxu0 0
    %116 = vmatpush1.bf16.msra.mxu0 %v98
    %117 = vmatprep.subr.bf16.mxu0 0
    %118 = vmatpush1.bf16.msra.mxu0 %v99
    %119 = vmatprep.subr.bf16.mxu0 0
    %120 = vmatpush1.bf16.msra.mxu0 %v100
    %121 = vmatprep.subr.bf16.mxu0 0
    %122 = vmatpush1.bf16.msra.mxu0 %v101
    %123 = vmatprep.subr.bf16.mxu0 0
    %124 = vmatpush1.bf16.msra.mxu0 %v102
    %125 = vmatprep.subr.bf16.mxu0 0
    %126 = vmatpush1.bf16.msra.mxu0 %v103
    %127 = vmatprep.subr.bf16.mxu0 0
    %128 = vmatpush1.bf16.msra.mxu0 %v104
    %129 = vmatprep.subr.bf16.mxu0 0
    %130 = vmatpush1.bf16.msra.mxu0 0
    %131 = vmatprep.subr.bf16.mxu0 0
    %132 = vmatpush1.bf16.msra.mxu0 0
    %133 = vmatprep.subr.bf16.mxu0 0
    %134 = vmatpush1.bf16.msra.mxu0 0
    %135 = vmatprep.subr.bf16.mxu0 0
    %136 = vmatpush1.bf16.msra.mxu0 0
    %137 = vmatprep.subr.bf16.mxu0 0
    %138 = vmatpush1.bf16.msra.mxu0 0
    %139 = vmatprep.subr.bf16.mxu0 0
    %140 = vmatpush1.bf16.msra.mxu0 0
    %141 = vmatprep.subr.bf16.mxu0 0
    %142 = vmatpush1.bf16.msra.mxu0 0
    %143 = vmatprep.subr.bf16.mxu0 0
    %144 = vmatpush1.bf16.msra.mxu0 0
    %145 = vmatprep.mubr.bf16.mxu0 0
    %146 = vmatmul.mubr.bf16.gmra.mrb[0].mxu0 %v48
    %v147 = vpop.f32.mrb[0].mxu0
    %v148 = vadd.f32 0.0, %v147
    %v149 = vpop.f32.mrb[0].mxu0
    %v150 = vpop.f32.mrb[0].mxu0
    %v151 = vpop.f32.mrb[0].mxu0
    %152 = vdwg.mxu0
    %v153 = vadd.f32 %v47, %v148
    %154 = vst [vmem:[#allocation2] sm:$0xff] %v153
    // Predicated region
    $region26: #{tpu_custom_call.1} parent=1 // pred_check
      %p155 = pneg %p42
    $region27: #{tpu_custom_call.1} parent=1 // pred_check_branch
      %157 = sbr.rel (%p155) target = $region29
    $region28: #{tpu_custom_call.1} parent=1 // pred_region
      %v158 = vld [vmem:[%s2] sm:$0x1]
      %v159 = vld [vmem:[%s2 + $0x1] sm:$0x1]
      %v160 = vld [vmem:[#allocation2] sm:$0xff]
      %v161 = vlaneseq
      %v162 = vshrl.u32 %v161, 7
      %v163 = vsub.s32 0, %v162
      %v164 = vrot.slane %v158, %v163
      %v165 = vmul.f32 %v160, %v164
      %v166 = vlaneseq
      %v167 = vshrl.u32 %v166, 7
      %v168 = vsub.s32 0, %v167
      %v169 = vrot.slane %v159, %v168
      %v170 = vadd.f32 %v165, %v169
      %vm171 = vcmp.ge.f32.partialorder %v170, 0.0
      %v172 = vmul.f32 %v170, 0.2
      %v173 = vsel %vm171, %v170, %v172
      %174 = vst [vmem:[#allocation8] sm:$0xff] %v173
    $region29: #{tpu_custom_call.1} parent=1 // pred_fallthru
      _
    // Predicated region
    $region30: #{tpu_custom_call.1} parent=1 // pred_check
      _
    $region31: #{tpu_custom_call.1} parent=1 // pred_check_branch
      %176 = sbr.rel (0) target = $region33
    $region32: #{tpu_custom_call.1} parent=1 // pred_region
      %s178 = ssub.s32 128, 128
      %179 = vsyncadd [#allocation5], %s178
      %s181 = sshll.u32 [#allocation8], 4
      %s182 = int_to_ptr.vmem [resolvable:$true] %s181
      %184 = dma.vmem_to_hbm [thread:$0]  %s182, 128, %s3, [#allocation5]
    $region33: #{tpu_custom_call.1} parent=1 // pred_fallthru
      _
    // Predicated region
    $region34: #{tpu_custom_call.1} parent=1 // pred_check
      _
    $region35: #{tpu_custom_call.1} parent=1 // pred_check_branch
      %186 = sbr.rel (0) target = $region37
    $region36: #{tpu_custom_call.1} parent=1 // pred_region
      %187 = dma.done [#allocation5], 128
    $region37: #{tpu_custom_call.1} parent=1 // pred_fallthru
      _
    %188 = vsyncpa [#allocation4], 1
    %189 = vsyncpa [#allocation7], 1
    %190 = vsyncpa [#allocation5], 1

</llo_original>
